<compile_context>
chip_gen: v6e
topology: v6e:2x2x1
jax: 0.10.0
libtpu: 0.0.40
codegen_flags: <defaults>
</compile_context>

<pallas_src>
import jax
import jax.numpy as jnp
from jax.experimental import pallas as pl
from jax.experimental.pallas import tpu as pltpu


def _round_up(n: int, m: int) -> int:
    return ((n + m - 1) // m) * m


def fcnet_kernel(x_ref, w0_ref, b0_ref, w1_ref, b1_ref, w2_ref, b2_ref, o_ref):
    # layer0: Linear + ReLU  (bf16 MXU inputs, f32 accumulate, f32 elementwise)
    x = x_ref[...].astype(jnp.bfloat16)          # in-register cast, no HBM pass
    h = jnp.dot(x, w0_ref[...], preferred_element_type=jnp.float32)
    h = jnp.maximum(h + b0_ref[...], 0.0)
    # layer1: Linear + ReLU
    h = jnp.dot(h.astype(jnp.bfloat16), w1_ref[...],
                preferred_element_type=jnp.float32)
    h = jnp.maximum(h + b1_ref[...], 0.0)
    # classifier: Linear (no activation), slim dim_output-wide store
    y = jnp.dot(h.astype(jnp.bfloat16), w2_ref[...],
                preferred_element_type=jnp.float32)
    o_ref[...] = (y + b2_ref[...]).astype(o_ref.dtype)


def prepare_params(params):
    """One-time param prep: cast weights to bf16 (MXU inputs), keep biases f32."""
    prepped = {}
    n_layers = len(params) // 2
    for i in range(n_layers):
        prepped[f"w{i}"] = params[f"w{i}"].astype(jnp.bfloat16)
        prepped[f"b{i}"] = params[f"b{i}"].astype(jnp.float32)
    return prepped


def fcnet_forward(x, prepped, *, tile_m=2048):
    """x: (B, dim_input) float32; prepped: bf16 weights (in, out) + f32 biases (1, out)."""
    w0, b0 = prepped["w0"], prepped["b0"]
    w1, b1 = prepped["w1"], prepped["b1"]
    w2, b2 = prepped["w2"], prepped["b2"]

    B, dim_input = x.shape
    h0 = w0.shape[1]
    h1 = w1.shape[1]
    dim_output = w2.shape[1]

    # batch tile: multiple of 8, capped by (rounded-up) batch; ragged last block
    tm = min(int(tile_m), _round_up(B, 8))
    tm = _round_up(tm, 8)
    grid = (pl.cdiv(B, tm),)

    flops = 2 * B * (dim_input * h0 + h0 * h1 + h1 * dim_output)
    bytes_accessed = (
        B * dim_input * 4                 # x (f32 in)
        + B * dim_output * 4              # output (f32 out)
        + (w0.size + w1.size + w2.size) * 2   # bf16 weights
        + (b0.size + b1.size + b2.size) * 4   # f32 biases
    )

    resident = lambda arr: pl.BlockSpec(arr.shape, lambda i: (0, 0))

    out = pl.pallas_call(
        fcnet_kernel,
        out_shape=jax.ShapeDtypeStruct((B, dim_output), jnp.float32),
        grid=grid,
        in_specs=[
            pl.BlockSpec((tm, dim_input), lambda i: (i, 0)),  # x: tiled along batch
            resident(w0), resident(b0),                        # weights/biases: VMEM-resident
            resident(w1), resident(b1),
            resident(w2), resident(b2),
        ],
        out_specs=pl.BlockSpec((tm, dim_output), lambda i: (i, 0)),
        compiler_params=pltpu.CompilerParams(
            dimension_semantics=("parallel",),
        ),
        cost_estimate=pl.CostEstimate(
            flops=flops, transcendentals=0, bytes_accessed=bytes_accessed),
    )(x, w0, b0, w1, b1, w2, b2)

    return out


def init_params(key, dim_input, num_hidden_units, dim_output):
    """Deterministic init mimicking torch.nn.Linear's U(-1/sqrt(fan_in), 1/sqrt(fan_in))."""
    dims = [dim_input] + list(num_hidden_units) + [dim_output]
    params = {}
    for i, (fan_in, fan_out) in enumerate(zip(dims[:-1], dims[1:])):
        key, kw, kb = jax.random.split(key, 3)
        bound = 1.0 / (fan_in ** 0.5)
        # stored as (in, out) = torch weight (out, in) transposed
        params[f"w{i}"] = jax.random.uniform(
            kw, (fan_in, fan_out), jnp.float32, minval=-bound, maxval=bound)
        params[f"b{i}"] = jax.random.uniform(
            kb, (1, fan_out), jnp.float32, minval=-bound, maxval=bound)
    return params


def fcnet_reference(x, params):
    """f32 reference mirroring the kernel's bf16 matmul inputs / f32 accumulation."""
    bf = lambda a: a.astype(jnp.bfloat16).astype(jnp.float32)
    h = jnp.maximum(bf(x) @ bf(params["w0"]) + params["b0"], 0.0)
    h = jnp.maximum(bf(h) @ bf(params["w1"]) + params["b1"], 0.0)
    return bf(h) @ bf(params["w2"]) + params["b2"]


if __name__ == "__main__":
    key = jax.random.PRNGKey(0)

    batch = 64
    dim_input = 16
    num_hidden_units = (32, 32)
    dim_output = 8

    kx, kp = jax.random.split(key)
    x = jax.random.normal(kx, (batch, dim_input), jnp.float32)
    params = init_params(kp, dim_input, num_hidden_units, dim_output)
    prepped = prepare_params(params)

    out = fcnet_forward(x, prepped)
    out = jax.block_until_ready(out)

    ref = fcnet_reference(x, params)
    assert out.shape == (batch, dim_output)
    assert jnp.allclose(out, ref, atol=1e-3, rtol=1e-3), \
        f"max abs err {jnp.max(jnp.abs(out - ref))}"

    print("KERNEL_OK")
</pallas_src>

<mosaic_0001>
module attributes {stable_mosaic.version = 11 : i64} {
  func.func @fcnet_kernel(%arg0: i32, %arg1: memref<64x16xf32, #tpu.memory_space<vmem>>, %arg2: memref<16x32xbf16, #tpu.memory_space<vmem>>, %arg3: memref<1x32xf32, #tpu.memory_space<vmem>>, %arg4: memref<32x32xbf16, #tpu.memory_space<vmem>>, %arg5: memref<1x32xf32, #tpu.memory_space<vmem>>, %arg6: memref<32x8xbf16, #tpu.memory_space<vmem>>, %arg7: memref<1x8xf32, #tpu.memory_space<vmem>>, %arg8: memref<64x8xf32, #tpu.memory_space<vmem>>) attributes {dimension_semantics = [#tpu.dimension_semantics<parallel>], iteration_bounds = array<i64: 1>, scalar_prefetch = 0 : i64, scratch_operands = 0 : i64, tpu.core_type = #tpu.core_type<tc>, window_params = [{transform_indices = @transform_0, window_bounds = array<i64: 64, 16>}, {pipeline_mode = #tpu.pipeline_mode<synchronous>, transform_indices = @transform_1, window_bounds = array<i64: 16, 32>}, {pipeline_mode = #tpu.pipeline_mode<synchronous>, transform_indices = @transform_2, window_bounds = array<i64: 1, 32>}, {pipeline_mode = #tpu.pipeline_mode<synchronous>, transform_indices = @transform_3, window_bounds = array<i64: 32, 32>}, {pipeline_mode = #tpu.pipeline_mode<synchronous>, transform_indices = @transform_4, window_bounds = array<i64: 1, 32>}, {pipeline_mode = #tpu.pipeline_mode<synchronous>, transform_indices = @transform_5, window_bounds = array<i64: 32, 8>}, {pipeline_mode = #tpu.pipeline_mode<synchronous>, transform_indices = @transform_6, window_bounds = array<i64: 1, 8>}, {transform_indices = @transform_7, window_bounds = array<i64: 64, 8>}]} {
    %c0 = arith.constant 0 : index
    %c0_0 = arith.constant 0 : index
    %0 = vector.load %arg1[%c0, %c0_0] : memref<64x16xf32, #tpu.memory_space<vmem>>, vector<64x16xf32>
    %1 = arith.truncf %0 : vector<64x16xf32> to vector<64x16xbf16>
    %c0_1 = arith.constant 0 : index
    %c0_2 = arith.constant 0 : index
    %2 = vector.load %arg2[%c0_1, %c0_2] : memref<16x32xbf16, #tpu.memory_space<vmem>>, vector<16x32xbf16>
    %cst = arith.constant dense<0.000000e+00> : vector<64x32xf32>
    %3 = tpu.matmul %1, %2, %cst {dimension_numbers = #tpu.dot_dimension_numbers<[1], [0], [0], [1], [0, 0, 1, 1], [], []>} : vector<64x16xbf16>, vector<16x32xbf16>, vector<64x32xf32> -> vector<64x32xf32>
    %c0_3 = arith.constant 0 : index
    %c0_4 = arith.constant 0 : index
    %4 = vector.load %arg3[%c0_3, %c0_4] : memref<1x32xf32, #tpu.memory_space<vmem>>, vector<1x32xf32>
    %5 = vector.broadcast %4 : vector<1x32xf32> to vector<64x32xf32>
    %6 = arith.addf %3, %5 : vector<64x32xf32>
    %cst_5 = arith.constant 0.000000e+00 : f32
    %7 = vector.broadcast %cst_5 : f32 to vector<64x32xf32>
    %8 = arith.maximumf %6, %7 : vector<64x32xf32>
    %9 = arith.truncf %8 : vector<64x32xf32> to vector<64x32xbf16>
    %c0_6 = arith.constant 0 : index
    %c0_7 = arith.constant 0 : index
    %10 = vector.load %arg4[%c0_6, %c0_7] : memref<32x32xbf16, #tpu.memory_space<vmem>>, vector<32x32xbf16>
    %cst_8 = arith.constant dense<0.000000e+00> : vector<64x32xf32>
    %11 = tpu.matmul %9, %10, %cst_8 {dimension_numbers = #tpu.dot_dimension_numbers<[1], [0], [0], [1], [0, 0, 1, 1], [], []>} : vector<64x32xbf16>, vector<32x32xbf16>, vector<64x32xf32> -> vector<64x32xf32>
    %c0_9 = arith.constant 0 : index
    %c0_10 = arith.constant 0 : index
    %12 = vector.load %arg5[%c0_9, %c0_10] : memref<1x32xf32, #tpu.memory_space<vmem>>, vector<1x32xf32>
    %13 = vector.broadcast %12 : vector<1x32xf32> to vector<64x32xf32>
    %14 = arith.addf %11, %13 : vector<64x32xf32>
    %cst_11 = arith.constant 0.000000e+00 : f32
    %15 = vector.broadcast %cst_11 : f32 to vector<64x32xf32>
    %16 = arith.maximumf %14, %15 : vector<64x32xf32>
    %17 = arith.truncf %16 : vector<64x32xf32> to vector<64x32xbf16>
    %c0_12 = arith.constant 0 : index
    %c0_13 = arith.constant 0 : index
    %18 = vector.load %arg6[%c0_12, %c0_13] : memref<32x8xbf16, #tpu.memory_space<vmem>>, vector<32x8xbf16>
    %cst_14 = arith.constant dense<0.000000e+00> : vector<64x8xf32>
    %19 = tpu.matmul %17, %18, %cst_14 {dimension_numbers = #tpu.dot_dimension_numbers<[1], [0], [0], [1], [0, 0, 1, 1], [], []>} : vector<64x32xbf16>, vector<32x8xbf16>, vector<64x8xf32> -> vector<64x8xf32>
    %c0_15 = arith.constant 0 : index
    %c0_16 = arith.constant 0 : index
    %20 = vector.load %arg7[%c0_15, %c0_16] : memref<1x8xf32, #tpu.memory_space<vmem>>, vector<1x8xf32>
    %21 = vector.broadcast %20 : vector<1x8xf32> to vector<64x8xf32>
    %22 = arith.addf %19, %21 : vector<64x8xf32>
    %c0_17 = arith.constant 0 : index
    %c0_18 = arith.constant 0 : index
    %23 = vector.load %arg8[%c0_17, %c0_18] : memref<64x8xf32, #tpu.memory_space<vmem>>, vector<64x8xf32>
    tpu.vector_store %arg8[%c0_17, %c0_18], %22 {strides = array<i32>} : memref<64x8xf32, #tpu.memory_space<vmem>>, vector<64x8xf32>,
    return
  }
  func.func @transform_0(%arg0: i32) -> (i32, i32) {
    %c0_i32 = arith.constant 0 : i32
    %c0_i32_0 = arith.constant 0 : i32
    return %arg0, %c0_i32 : i32, i32
  }
  func.func @transform_1(%arg0: i32) -> (i32, i32) {
    %c0_i32 = arith.constant 0 : i32
    %c0_i32_0 = arith.constant 0 : i32
    %c0_i32_1 = arith.constant 0 : i32
    return %c0_i32, %c0_i32_0 : i32, i32
  }
  func.func @transform_2(%arg0: i32) -> (i32, i32) {
    %c0_i32 = arith.constant 0 : i32
    %c0_i32_0 = arith.constant 0 : i32
    %c0_i32_1 = arith.constant 0 : i32
    return %c0_i32, %c0_i32_0 : i32, i32
  }
  func.func @transform_3(%arg0: i32) -> (i32, i32) {
    %c0_i32 = arith.constant 0 : i32
    %c0_i32_0 = arith.constant 0 : i32
    %c0_i32_1 = arith.constant 0 : i32
    return %c0_i32, %c0_i32_0 : i32, i32
  }
  func.func @transform_4(%arg0: i32) -> (i32, i32) {
    %c0_i32 = arith.constant 0 : i32
    %c0_i32_0 = arith.constant 0 : i32
    %c0_i32_1 = arith.constant 0 : i32
    return %c0_i32, %c0_i32_0 : i32, i32
  }
  func.func @transform_5(%arg0: i32) -> (i32, i32) {
    %c0_i32 = arith.constant 0 : i32
    %c0_i32_0 = arith.constant 0 : i32
    %c0_i32_1 = arith.constant 0 : i32
    return %c0_i32, %c0_i32_0 : i32, i32
  }
  func.func @transform_6(%arg0: i32) -> (i32, i32) {
    %c0_i32 = arith.constant 0 : i32
    %c0_i32_0 = arith.constant 0 : i32
    %c0_i32_1 = arith.constant 0 : i32
    return %c0_i32, %c0_i32_0 : i32, i32
  }
  func.func @transform_7(%arg0: i32) -> (i32, i32) {
    %c0_i32 = arith.constant 0 : i32
    %c0_i32_0 = arith.constant 0 : i32
    return %arg0, %c0_i32 : i32, i32
  }
}

</mosaic_0001>

<llo_original>
// kernel: tpu_custom_call.1
$region0: #{tpu_custom_call.1}
  #allocation0 [shape = 'u32[]', space=smem, size = 0x4, offset = 0x4, fixed_abs, tag = 'smem constant byte address 0x4 - core index']
  #allocation1 [shape = 'u32[144,128]{1,0:T(1,128)}', space=vmem, size = 0x12000, scoped, tag = 'internal scratch']
  %s0 = inlined_call_operand.vmem [shape: f32[64,16], index: 0, kind: input, shape index: {}]
  %s1 = inlined_call_operand.vmem [shape: bf16[16,32], index: 1, kind: input, shape index: {}]
  %s2 = inlined_call_operand.vmem [shape: f32[1,32], index: 2, kind: input, shape index: {}]
  %s3 = inlined_call_operand.vmem [shape: bf16[32,32], index: 3, kind: input, shape index: {}]
  %s4 = inlined_call_operand.vmem [shape: f32[1,32], index: 4, kind: input, shape index: {}]
  %s5 = inlined_call_operand.vmem [shape: bf16[32,8], index: 5, kind: input, shape index: {}]
  %s6 = inlined_call_operand.vmem [shape: f32[1,8], index: 6, kind: input, shape index: {}]
  %s7 = inlined_call_operand.vmem [shape: f32[64,8], index: 7, kind: output, shape index: {}]
  %s8 = sld [smem:[#allocation0]]
  $region38: #{tpu_custom_call.1} parent=0
    _
  %s10 = ssub.s32 1, %s8
  %s11 = scalar_select 0, %s10, %s8
  // Predicated region
  $region2: #{tpu_custom_call.1} parent=0 // pred_check
    _
  $region3: #{tpu_custom_call.1} parent=0 // pred_check_branch
    %13 = sbr.rel (0) target = $region5
  $region4: #{tpu_custom_call.1} parent=0 // pred_region
    _
  $region5: #{tpu_custom_call.1} parent=0 // pred_fallthru
    _
  // Predicated region
  $region6: #{tpu_custom_call.1} parent=0 // pred_check
    _
  $region7: #{tpu_custom_call.1} parent=0 // pred_check_branch
    %15 = sbr.rel (0) target = $region9
  $region8: #{tpu_custom_call.1} parent=0 // pred_region
    _
  $region9: #{tpu_custom_call.1} parent=0 // pred_fallthru
    _
  // Predicated region
  $region10: #{tpu_custom_call.1} parent=0 // pred_check
    _
  $region11: #{tpu_custom_call.1} parent=0 // pred_check_branch
    %17 = sbr.rel (0) target = $region13
  $region12: #{tpu_custom_call.1} parent=0 // pred_region
    _
  $region13: #{tpu_custom_call.1} parent=0 // pred_fallthru
    _
  // Predicated region
  $region14: #{tpu_custom_call.1} parent=0 // pred_check
    _
  $region15: #{tpu_custom_call.1} parent=0 // pred_check_branch
    %19 = sbr.rel (0) target = $region17
  $region16: #{tpu_custom_call.1} parent=0 // pred_region
    _
  $region17: #{tpu_custom_call.1} parent=0 // pred_fallthru
    _
  // Predicated region
  $region18: #{tpu_custom_call.1} parent=0 // pred_check
    _
  $region19: #{tpu_custom_call.1} parent=0 // pred_check_branch
    %21 = sbr.rel (0) target = $region21
  $region20: #{tpu_custom_call.1} parent=0 // pred_region
    _
  $region21: #{tpu_custom_call.1} parent=0 // pred_fallthru
    _
  // Predicated region
  $region22: #{tpu_custom_call.1} parent=0 // pred_check
    _
  $region23: #{tpu_custom_call.1} parent=0 // pred_check_branch
    %23 = sbr.rel (0) target = $region25
  $region24: #{tpu_custom_call.1} parent=0 // pred_region
    _
  $region25: #{tpu_custom_call.1} parent=0 // pred_fallthru
    _
  // Predicated region
  $region26: #{tpu_custom_call.1} parent=0 // pred_check
    _
  $region27: #{tpu_custom_call.1} parent=0 // pred_check_branch
    %25 = sbr.rel (0) target = $region29
  $region28: #{tpu_custom_call.1} parent=0 // pred_region
    _
  $region29: #{tpu_custom_call.1} parent=0 // pred_fallthru
    _
  %v27 = vld [vmem:[%s0] sm:$0xff]
  %v28 = vld [vmem:[%s0 + $0x8] sm:$0xff]
  %v29 = vld [vmem:[%s0 + $0x10] sm:$0xff]
  %v30 = vld [vmem:[%s0 + $0x18] sm:$0xff]
  %v31 = vld [vmem:[%s0 + $0x20] sm:$0xff]
  %v32 = vld [vmem:[%s0 + $0x28] sm:$0xff]
  %v33 = vld [vmem:[%s0 + $0x30] sm:$0xff]
  %v34 = vld [vmem:[%s0 + $0x38] sm:$0xff]
  %v35 = vpack.c.bf16 %v28, %v27
  %v36 = vpack.c.bf16 %v30, %v29
  %v37 = vpack.c.bf16 %v32, %v31
  %v38 = vpack.c.bf16 %v34, %v33
  %v39 = vld [vmem:[%s1] sm:$0xf]
  %v40 = vld [vmem:[%s1 + $0x4] sm:$0xf]
  %v41 = vld [vmem:[%s2] sm:$0x1]
  %v43 = vlaneseq
  %v44 = vshrl.u32 %v43, 7
  %v45 = vsub.s32 0, %v44
  %v46 = vrot.slane %v41, %v45
  %v50 = vunpack.c.l.b16 %v39
  %v51 = vunpack.c.l.b16 %v40
  %v52 = vpack.c.b16 %v51, %v50
  %vm54 = vcmask 130048
  %v56 = vsel %vm54, %v35, 0
  %v59 = vsel %vm54, %v36, 0
  %v62 = vsel %vm54, %v37, 0
  %v65 = vsel %vm54, %v38, 0
  %67 = vmatprep.subr.bf16.mxu0 0
  %68 = vmatpush1.bf16.msra.mxu0 0
  %69 = vmatprep.subr.bf16.mxu0 0
  %70 = vmatpush1.bf16.msra.mxu0 0
  %71 = vmatprep.subr.bf16.mxu0 0
  %72 = vmatpush1.bf16.msra.mxu0 0
  %73 = vmatprep.subr.bf16.mxu0 0
  %74 = vmatpush1.bf16.msra.mxu0 0
  %75 = vmatprep.subr.bf16.mxu0 0
  %76 = vmatpush1.bf16.msra.mxu0 0
  %77 = vmatprep.subr.bf16.mxu0 0
  %78 = vmatpush1.bf16.msra.mxu0 0
  %79 = vmatprep.subr.bf16.mxu0 0
  %80 = vmatpush1.bf16.msra.mxu0 0
  %81 = vmatprep.subr.bf16.mxu0 0
  %82 = vmatpush1.bf16.msra.mxu0 %v52
  %83 = vmatprep.subr.bf16.mxu0 0
  %84 = vmatpush2.bf16.msra.mxu0 0
  %85 = vmatprep.subr.bf16.mxu0 0
  %86 = vmatpush2.bf16.msra.mxu0 0
  %87 = vmatprep.subr.bf16.mxu0 0
  %88 = vmatpush2.bf16.msra.mxu0 0
  %89 = vmatprep.subr.bf16.mxu0 0
  %90 = vmatpush2.bf16.msra.mxu0 0
  %91 = vmatprep.subr.bf16.mxu0 0
  %92 = vmatpush2.bf16.msra.mxu0 0
  %93 = vmatprep.subr.bf16.mxu0 0
  %94 = vmatpush2.bf16.msra.mxu0 0
  %95 = vmatprep.subr.bf16.mxu0 0
  %96 = vmatpush2.bf16.msra.mxu0 0
  %97 = vmatprep.subr.bf16.mxu0 0
  %98 = vmatpush2.bf16.msra.mxu0 0
  %99 = vmatprep.mubr.bf16.mxu0 0
  %100 = vmatmul.mubr.bf16.gmra.mxu0 %v56
  %v101 = vpop.f32.mrf.mxu0
  %v102 = vadd.f32 %v46, %v101
  %v103 = vpop.f32.mrf.mxu0
  %v104 = vpop.f32.mrf.mxu0
  %v105 = vadd.f32 %v46, %v104
  %v106 = vpop.f32.mrf.mxu0
  %107 = vmatprep.mubr.bf16.mxu0 0
  %108 = vmatmul.mubr.bf16.gmra.mxu0 %v59
  %v109 = vpop.f32.mrf.mxu0
  %v110 = vadd.f32 %v46, %v109
  %v111 = vpop.f32.mrf.mxu0
  %v112 = vpop.f32.mrf.mxu0
  %v113 = vadd.f32 %v46, %v112
  %v114 = vpop.f32.mrf.mxu0
  %115 = vmatprep.mubr.bf16.mxu0 0
  %116 = vmatmul.mubr.bf16.gmra.mxu0 %v62
  %v117 = vpop.f32.mrf.mxu0
  %v118 = vadd.f32 %v46, %v117
  %v119 = vpop.f32.mrf.mxu0
  %v120 = vpop.f32.mrf.mxu0
  %v121 = vadd.f32 %v46, %v120
  %v122 = vpop.f32.mrf.mxu0
  %123 = vmatprep.mubr.bf16.mxu0 0
  %124 = vmatmul.mubr.bf16.gmra.mxu0 %v65
  %v125 = vpop.f32.mrf.mxu0
  %v126 = vadd.f32 %v46, %v125
  %v127 = vpop.f32.mrf.mxu0
  %v128 = vpop.f32.mrf.mxu0
  %v129 = vadd.f32 %v46, %v128
  %v130 = vpop.f32.mrf.mxu0
  %131 = vdwg.mxu0
  %v132 = vmax.f32 %v102, 0.0
  %v133 = vmax.f32 %v105, 0.0
  %v134 = vmax.f32 %v110, 0.0
  %v135 = vmax.f32 %v113, 0.0
  %v136 = vmax.f32 %v118, 0.0
  %v137 = vmax.f32 %v121, 0.0
  %v138 = vmax.f32 %v126, 0.0
  %v139 = vmax.f32 %v129, 0.0
  %v140 = vpack.c.bf16 %v133, %v132
  %v141 = vpack.c.bf16 %v135, %v134
  %v142 = vpack.c.bf16 %v137, %v136
  %v143 = vpack.c.bf16 %v139, %v138
  %v144 = vld [vmem:[%s3] sm:$0xf]
  %v145 = vld [vmem:[%s3 + $0x4] sm:$0xf]
  %v146 = vld [vmem:[%s3 + $0x8] sm:$0xf]
  %v147 = vld [vmem:[%s3 + $0xc] sm:$0xf]
  %v148 = vld [vmem:[%s4] sm:$0x1]
  %v150 = vlaneseq
  %v151 = vshrl.u32 %v150, 7
  %v152 = vsub.s32 0, %v151
  %v153 = vrot.slane %v148, %v152
  %v159 = vunpack.c.l.b16 %v144
  %v160 = vunpack.c.l.b16 %v145
  %v161 = vunpack.c.l.b16 %v146
  %v162 = vunpack.c.l.b16 %v147
  %v163 = vpack.c.b16 %v160, %v159
  %v164 = vpack.c.b16 %v162, %v161
  %vm167 = vcmask 261120
  %v169 = vsel %vm167, %v140, 0
  %v172 = vsel %vm167, %v141, 0
  %v175 = vsel %vm167, %v142, 0
  %v178 = vsel %vm167, %v143, 0
  %180 = vmatprep.subr.bf16.mxu0 0
  %181 = vmatpush1.bf16.msra.mxu0 0
  %182 = vmatprep.subr.bf16.mxu0 0
  %183 = vmatpush1.bf16.msra.mxu0 0
  %184 = vmatprep.subr.bf16.mxu0 0
  %185 = vmatpush1.bf16.msra.mxu0 0
  %186 = vmatprep.subr.bf16.mxu0 0
  %187 = vmatpush1.bf16.msra.mxu0 0
  %188 = vmatprep.subr.bf16.mxu0 0
  %189 = vmatpush1.bf16.msra.mxu0 0
  %190 = vmatprep.subr.bf16.mxu0 0
  %191 = vmatpush1.bf16.msra.mxu0 0
  %192 = vmatprep.subr.bf16.mxu0 0
  %193 = vmatpush1.bf16.msra.mxu0 %v164
  %194 = vmatprep.subr.bf16.mxu0 0
  %195 = vmatpush1.bf16.msra.mxu0 %v163
  %196 = vmatprep.subr.bf16.mxu0 0
  %197 = vmatpush2.bf16.msra.mxu0 0
  %198 = vmatprep.subr.bf16.mxu0 0
  %199 = vmatpush2.bf16.msra.mxu0 0
  %200 = vmatprep.subr.bf16.mxu0 0
  %201 = vmatpush2.bf16.msra.mxu0 0
  %202 = vmatprep.subr.bf16.mxu0 0
  %203 = vmatpush2.bf16.msra.mxu0 0
  %204 = vmatprep.subr.bf16.mxu0 0
  %205 = vmatpush2.bf16.msra.mxu0 0
  %206 = vmatprep.subr.bf16.mxu0 0
  %207 = vmatpush2.bf16.msra.mxu0 0
  %208 = vmatprep.subr.bf16.mxu0 0
  %209 = vmatpush2.bf16.msra.mxu0 0
  %210 = vmatprep.subr.bf16.mxu0 0
  %211 = vmatpush2.bf16.msra.mxu0 0
  %212 = vmatprep.mubr.bf16.mxu0 0
  %213 = vmatmul.mubr.bf16.gmra.mxu0 %v169
  %v214 = vpop.f32.mrf.mxu0
  %v215 = vadd.f32 %v153, %v214
  %v216 = vpop.f32.mrf.mxu0
  %v217 = vpop.f32.mrf.mxu0
  %v218 = vadd.f32 %v153, %v217
  %v219 = vpop.f32.mrf.mxu0
  %220 = vmatprep.mubr.bf16.mxu0 0
  %221 = vmatmul.mubr.bf16.gmra.mxu0 %v172
  %v222 = vpop.f32.mrf.mxu0
  %v223 = vadd.f32 %v153, %v222
  %v224 = vpop.f32.mrf.mxu0
  %v225 = vpop.f32.mrf.mxu0
  %v226 = vadd.f32 %v153, %v225
  %v227 = vpop.f32.mrf.mxu0
  %228 = vmatprep.mubr.bf16.mxu0 0
  %229 = vmatmul.mubr.bf16.gmra.mxu0 %v175
  %v230 = vpop.f32.mrf.mxu0
  %v231 = vadd.f32 %v153, %v230
  %v232 = vpop.f32.mrf.mxu0
  %v233 = vpop.f32.mrf.mxu0
  %v234 = vadd.f32 %v153, %v233
  %v235 = vpop.f32.mrf.mxu0
  %236 = vmatprep.mubr.bf16.mxu0 0
  %237 = vmatmul.mubr.bf16.gmra.mxu0 %v178
  %v238 = vpop.f32.mrf.mxu0
  %v239 = vadd.f32 %v153, %v238
  %v240 = vpop.f32.mrf.mxu0
  %v241 = vpop.f32.mrf.mxu0
  %v242 = vadd.f32 %v153, %v241
  %v243 = vpop.f32.mrf.mxu0
  %244 = vdwg.mxu0
  %v245 = vmax.f32 %v215, 0.0
  %v246 = vmax.f32 %v218, 0.0
  %v247 = vmax.f32 %v223, 0.0
  %v248 = vmax.f32 %v226, 0.0
  %v249 = vmax.f32 %v231, 0.0
  %v250 = vmax.f32 %v234, 0.0
  %v251 = vmax.f32 %v239, 0.0
  %v252 = vmax.f32 %v242, 0.0
  %v253 = vpack.c.bf16 %v246, %v245
  %v254 = vpack.c.bf16 %v248, %v247
  %v255 = vpack.c.bf16 %v250, %v249
  %v256 = vpack.c.bf16 %v252, %v251
  %v257 = vld [vmem:[%s5] sm:$0xf]
  %v258 = vld [vmem:[%s5 + $0x4] sm:$0xf]
  %v259 = vld [vmem:[%s5 + $0x8] sm:$0xf]
  %v260 = vld [vmem:[%s5 + $0xc] sm:$0xf]
  %v261 = vld [vmem:[%s6] sm:$0x1]
  %v263 = vlaneseq
  %v264 = vshrl.u32 %v263, 7
  %v265 = vsub.s32 0, %v264
  %v266 = vrot.slane %v261, %v265
  %v272 = vunpack.c.l.b16 %v257
  %v273 = vunpack.c.l.b16 %v258
  %v274 = vunpack.c.l.b16 %v259
  %v275 = vunpack.c.l.b16 %v260
  %v276 = vpack.c.b16 %v273, %v272
  %v277 = vpack.c.b16 %v275, %v274
  %v281 = vsel %vm167, %v253, 0
  %v284 = vsel %vm167, %v254, 0
  %v287 = vsel %vm167, %v255, 0
  %v290 = vsel %vm167, %v256, 0
  %292 = vmatprep.subr.bf16.mxu0 0
  %293 = vmatpush1.bf16.msra.mxu0 0
  %294 = vmatprep.subr.bf16.mxu0 0
  %295 = vmatpush1.bf16.msra.mxu0 0
  %296 = vmatprep.subr.bf16.mxu0 0
  %297 = vmatpush1.bf16.msra.mxu0 0
  %298 = vmatprep.subr.bf16.mxu0 0
  %299 = vmatpush1.bf16.msra.mxu0 0
  %300 = vmatprep.subr.bf16.mxu0 0
  %301 = vmatpush1.bf16.msra.mxu0 0
  %302 = vmatprep.subr.bf16.mxu0 0
  %303 = vmatpush1.bf16.msra.mxu0 0
  %304 = vmatprep.subr.bf16.mxu0 0
  %305 = vmatpush1.bf16.msra.mxu0 %v277
  %306 = vmatprep.subr.bf16.mxu0 0
  %307 = vmatpush1.bf16.msra.mxu0 %v276
  %308 = vmatprep.subr.bf16.mxu0 0
  %309 = vmatpush2.bf16.msra.mxu0 0
  %310 = vmatprep.subr.bf16.mxu0 0
  %311 = vmatpush2.bf16.msra.mxu0 0
  %312 = vmatprep.subr.bf16.mxu0 0
  %313 = vmatpush2.bf16.msra.mxu0 0
  %314 = vmatprep.subr.bf16.mxu0 0
  %315 = vmatpush2.bf16.msra.mxu0 0
  %316 = vmatprep.subr.bf16.mxu0 0
  %317 = vmatpush2.bf16.msra.mxu0 0
  %318 = vmatprep.subr.bf16.mxu0 0
  %319 = vmatpush2.bf16.msra.mxu0 0
  %320 = vmatprep.subr.bf16.mxu0 0
  %321 = vmatpush2.bf16.msra.mxu0 0
  %322 = vmatprep.subr.bf16.mxu0 0
  %323 = vmatpush2.bf16.msra.mxu0 0
  %324 = vmatprep.mubr.bf16.mxu0 0
  %325 = vmatmul.mubr.bf16.gmra.mxu0 %v281
  %v326 = vpop.f32.mrf.mxu0
  %v327 = vadd.f32 %v266, %v326
  %v328 = vpop.f32.mrf.mxu0
  %v329 = vpop.f32.mrf.mxu0
  %v330 = vadd.f32 %v266, %v329
  %v331 = vpop.f32.mrf.mxu0
  %332 = vmatprep.mubr.bf16.mxu0 0
  %333 = vmatmul.mubr.bf16.gmra.mxu0 %v284
  %v334 = vpop.f32.mrf.mxu0
  %v335 = vadd.f32 %v266, %v334
  %v336 = vpop.f32.mrf.mxu0
  %v337 = vpop.f32.mrf.mxu0
  %v338 = vadd.f32 %v266, %v337
  %v339 = vpop.f32.mrf.mxu0
  %340 = vmatprep.mubr.bf16.mxu0 0
  %341 = vmatmul.mubr.bf16.gmra.mxu0 %v287
  %v342 = vpop.f32.mrf.mxu0
  %v343 = vadd.f32 %v266, %v342
  %v344 = vpop.f32.mrf.mxu0
  %v345 = vpop.f32.mrf.mxu0
  %v346 = vadd.f32 %v266, %v345
  %v347 = vpop.f32.mrf.mxu0
  %348 = vmatprep.mubr.bf16.mxu0 0
  %349 = vmatmul.mubr.bf16.gmra.mxu0 %v290
  %v350 = vpop.f32.mrf.mxu0
  %v351 = vadd.f32 %v266, %v350
  %v352 = vpop.f32.mrf.mxu0
  %v353 = vpop.f32.mrf.mxu0
  %v354 = vadd.f32 %v266, %v353
  %v355 = vpop.f32.mrf.mxu0
  %356 = vdwg.mxu0
  %vm357 = vcmask 64512
  %358 = vst.msk [vmem:[%s7] sm:$0xff] %vm357, %v327
  %359 = vst.msk [vmem:[%s7 + $0x8] sm:$0xff] %vm357, %v330
  %360 = vst.msk [vmem:[%s7 + $0x10] sm:$0xff] %vm357, %v335
  %361 = vst.msk [vmem:[%s7 + $0x18] sm:$0xff] %vm357, %v338
  %362 = vst.msk [vmem:[%s7 + $0x20] sm:$0xff] %vm357, %v343
  %363 = vst.msk [vmem:[%s7 + $0x28] sm:$0xff] %vm357, %v346
  %364 = vst.msk [vmem:[%s7 + $0x30] sm:$0xff] %vm357, %v351
  %365 = vst.msk [vmem:[%s7 + $0x38] sm:$0xff] %vm357, %v354
  // Predicated region
  $region30: #{tpu_custom_call.1} parent=0 // pred_check
    _
  $region31: #{tpu_custom_call.1} parent=0 // pred_check_branch
    %367 = sbr.rel (0) target = $region33
  $region32: #{tpu_custom_call.1} parent=0 // pred_region
    _
  $region33: #{tpu_custom_call.1} parent=0 // pred_fallthru
    _
  // Predicated region
  $region34: #{tpu_custom_call.1} parent=0 // pred_check
    _
  $region35: #{tpu_custom_call.1} parent=0 // pred_check_branch
    %369 = sbr.rel (0) target = $region37
  $region36: #{tpu_custom_call.1} parent=0 // pred_region
    _
  $region37: #{tpu_custom_call.1} parent=0 // pred_fallthru
    _

</llo_original>
